<compile_context>
chip_gen: v7x
topology: tpu7x:2x2x1
jax: 0.10.0
libtpu: 0.0.40
codegen_flags: <defaults>
</compile_context>

<pallas_src>
import jax
import jax.numpy as jnp
from jax.experimental import pallas as pl
from jax.experimental.pallas import tpu as pltpu


# ---------------------------------------------------------------- config ----
IN_FEATURES = 24
OUT_FEATURES = 16
BATCH = 16

N_SIGMA = min(IN_FEATURES, OUT_FEATURES)
N_U_REFLECTORS = min(IN_FEATURES, OUT_FEATURES)   # module default
N_V_REFLECTORS = min(IN_FEATURES, OUT_FEATURES)
SIGMA_MIN, SIGMA_MAX = 0.1, 1.0
R = (SIGMA_MAX - SIGMA_MIN) / 2.0
SIGMA_MEAN = SIGMA_MIN + R


# ---------------------------------------------------------------- kernels ---
def _mm_kernel(x_ref, w_ref, o_ref):
    # Single MXU matmul per batch tile (bias=False path).  Inputs may be bf16;
    # accumulation is forced to f32.
    o_ref[...] = jnp.dot(
        x_ref[...], w_ref[...], preferred_element_type=jnp.float32
    ).astype(o_ref.dtype)


def _mm_bias_kernel(x_ref, w_ref, b_ref, o_ref):
    acc = jnp.dot(x_ref[...], w_ref[...], preferred_element_type=jnp.float32)
    o_ref[...] = (acc + b_ref[...].astype(jnp.float32)).astype(o_ref.dtype)


# ------------------------------------------------------------ tile picker ---
def _divisors(n):
    out = set()
    d = 1
    while d * d <= n:
        if n % d == 0:
            out.add(d)
            out.add(n // d)
        d += 1
    return sorted(out)


def _pick_tile(num_rows, max_rows_per_tile, want_split):
    """Pick a row-tile size such that:
       - num_rows % tile == 0
       - tile == num_rows OR tile % 8 == 0   (sublane alignment of partial tiles)
       - tile <= max_rows_per_tile when possible
       - if want_split (v7x core-awareness): prefer >= 2 grid steps, even count.
    """
    legal = [d for d in _divisors(num_rows) if d == num_rows or d % 8 == 0]
    capped = [d for d in legal if d <= max_rows_per_tile] or legal
    if want_split:
        split = [d for d in capped if num_rows // d >= 2]
        even = [d for d in split if (num_rows // d) % 2 == 0]
        pool = even or split
        if pool:
            return max(pool)
    return max(capped)


# --------------------------------------------------------------- wrapper ----
def spectral_linear(x, w_eff, bias=None, *,
                    input_dtype=jnp.bfloat16,
                    force_pallas=False,
                    max_tile_rows=2048):
    """out = x @ w_eff (+ bias), with w_eff the precomposed effective weight."""
    B, in_f = x.shape
    in_f_w, out_f = w_eff.shape
    assert in_f == in_f_w

    # ---- small-batch fast path: the whole problem is a couple of vregs, so a
    # pallas_call is pure fixed overhead; plain XLA wins on every generation.
    if not force_pallas and B <= 128:
        y = jnp.dot(x.astype(input_dtype), w_eff.astype(input_dtype),
                    preferred_element_type=jnp.float32)
        if bias is not None:
            y = y + bias.reshape(1, out_f).astype(jnp.float32)
        return y

    # ---- lane-dense slab packing: pack `pack` logical rows per slab row so
    # the output block width pack*out_f is a multiple of 128 lanes.
    pack = None
    for cand in (8, 16, 32, 64, 128):
        if (cand * out_f) % 128 == 0 and B % cand == 0:
            pack = cand
            break

    want_split = B >= 64   # v7x: keep both TensorCores fed once B is non-trivial

    if pack is not None:
        rows = B // pack
        slab_in = pack * in_f          # x slab width   (contiguous HBM bytes)
        slab_out = pack * out_f        # output slab width, multiple of 128
        # Free reshape: identical contiguous bytes, no data movement in HBM.
        x_slab = x.reshape(rows, slab_in).astype(input_dtype)
        # Block-diagonal weight: kron(I_pack, W_eff) maps packed rows in place.
        # Parameter-only work; tiny (pack*in_f x pack*out_f) and read once.
        w_block = jnp.kron(jnp.eye(pack, dtype=w_eff.dtype), w_eff).astype(input_dtype)

        tile_r = _pick_tile(rows, max(1, max_tile_rows // pack), want_split)
        n_tiles = rows // tile_r

        x_spec_kwargs = {}
        if n_tiles >= 4:
            # Per-tile compute is one tiny vmatmul; 3-deep buffering hides DMA
            # edges at tile boundaries (matters most on v7x's 3.2 TB/s HBM).
            x_spec_kwargs["pipeline_mode"] = pl.Buffered(3)

        in_specs = [pl.BlockSpec((tile_r, slab_in), lambda i: (i, 0), **x_spec_kwargs),
                    pl.BlockSpec((slab_in, slab_out), lambda i: (0, 0))]
        args = [x_slab, w_block]
        if bias is not None:
            b_slab = jnp.tile(bias.reshape(1, out_f), (1, pack)).astype(jnp.float32)
            in_specs.append(pl.BlockSpec((1, slab_out), lambda i: (0, 0)))
            args.append(b_slab)
            kernel = _mm_bias_kernel
        else:
            kernel = _mm_kernel

        out_slab = pl.pallas_call(
            kernel,
            out_shape=jax.ShapeDtypeStruct((rows, slab_out), jnp.float32),
            grid=(n_tiles,),
            in_specs=in_specs,
            out_specs=pl.BlockSpec((tile_r, slab_out), lambda i: (i, 0)),
            compiler_params=pltpu.CompilerParams(
                dimension_semantics=("parallel",)),
        )(*args)
        # Free reshape back to the logical (B, out_f) layout.
        return out_slab.reshape(B, out_f)

    # ---- fallback (B not divisible by the pack factor): plain formulation.
    tile_b = _pick_tile(B, max_tile_rows, want_split)
    n_tiles = B // tile_b
    in_specs = [pl.BlockSpec((tile_b, in_f), lambda i: (i, 0)),
                pl.BlockSpec((in_f, out_f), lambda i: (0, 0))]
    args = [x.astype(input_dtype), w_eff.astype(input_dtype)]
    if bias is not None:
        in_specs.append(pl.BlockSpec((1, out_f), lambda i: (0, 0)))
        args.append(bias.reshape(1, out_f).astype(jnp.float32))
        kernel = _mm_bias_kernel
    else:
        kernel = _mm_kernel
    return pl.pallas_call(
        kernel,
        out_shape=jax.ShapeDtypeStruct((B, out_f), jnp.float32),
        grid=(n_tiles,),
        in_specs=in_specs,
        out_specs=pl.BlockSpec((tile_b, out_f), lambda i: (i, 0)),
        compiler_params=pltpu.CompilerParams(dimension_semantics=("parallel",)),
    )(*args)


# ------------------------------------------------------- parameter setup ----
def make_params(key):
    kU, kV, kp = jax.random.split(key, 3)
    # Module init: U = triu(randn(in,in)), V = triu(randn(out,out)),
    #              p ~ 0.001*randn(nsigma), bias zeros (bias=False).
    U = jnp.triu(jax.random.normal(kU, (IN_FEATURES, IN_FEATURES), jnp.float32))
    V = jnp.triu(jax.random.normal(kV, (OUT_FEATURES, OUT_FEATURES), jnp.float32))
    p = 0.001 * jax.random.normal(kp, (N_SIGMA,), jnp.float32)
    bias = jnp.zeros((1, OUT_FEATURES), jnp.float32)

    # Masked reflector rows: reflector i acts on the last (dim - i) coords,
    # i.e. only entries >= i participate -> zero the first i entries
    # (a no-op for the triu init; kept for exactness).
    col = jnp.arange(IN_FEATURES)[None, :]
    row = jnp.arange(N_U_REFLECTORS)[:, None]
    uhat = jnp.where(col >= row, U[:N_U_REFLECTORS], 0.0)

    col = jnp.arange(OUT_FEATURES)[None, :]
    row = jnp.arange(N_V_REFLECTORS)[:, None]
    vhat = jnp.where(col >= row, V[:N_V_REFLECTORS], 0.0)

    # Constrained singular values (Sigma diagonal).
    sigma_vec = 2.0 * R * (jax.nn.sigmoid(p) - 0.5) + SIGMA_MEAN
    return uhat, sigma_vec, vhat, bias


def _householder_chain_rows(M, reflectors, order):
    """Apply z -> Hprod(z, reflectors[i], dim - i) for i in `order` to rows of M.

    NOTE: like the PyTorch Hprod there is deliberately NO guard against a
    zero-norm reflector row (that would divide by zero / NaN there too), so
    semantics match the module exactly.  Probability ~0 with the triu randn init.
    """
    for i in order:
        u = reflectors[i]                          # (dim,); first i entries are zero
        alpha = 2.0 * (M @ u) / jnp.sum(u * u)     # (rows,)
        M = M - alpha[:, None] * u[None, :]
    return M


def effective_weight(uhat, sigma_vec, vhat, out_features):
    """Precompose the U-chain, Sigma and V-chain into one (in, out) matrix.

    Parameter-only work, done once per parameter update in plain JAX (outside
    the kernel).  Equals the PyTorch module's effective_W() minus the bias.
    """
    in_features = uhat.shape[1]
    n_sig = sigma_vec.shape[0]
    M = jnp.eye(in_features, dtype=jnp.float32)
    M = _householder_chain_rows(M, uhat, range(uhat.shape[0]))               # Umultiply
    MS = M[:, :n_sig] * sigma_vec[None, :]                                   # @ Sigma (rect diag)
    if out_features > n_sig:
        MS = jnp.concatenate(
            [MS, jnp.zeros((in_features, out_features - n_sig), jnp.float32)],
            axis=1)
    M = _householder_chain_rows(MS, vhat, range(vhat.shape[0] - 1, -1, -1))  # Vmultiply
    return M


# ------------------------------------------------------ pure-JAX reference --
def reference_forward(x, uhat, sigma_vec, vhat, bias):
    """Faithful Hprod-chain forward (mirrors the PyTorch module step by step)."""
    z = x
    for i in range(N_U_REFLECTORS):
        u = uhat[i]
        alpha = 2.0 * (z @ u) / jnp.sum(u * u)
        z = z - alpha[:, None] * u[None, :]
    s_full = jnp.concatenate(
        [sigma_vec, jnp.zeros((abs(IN_FEATURES - OUT_FEATURES),), jnp.float32)])
    sigma = jnp.diag(s_full)[:IN_FEATURES, :OUT_FEATURES]
    y = z @ sigma
    for i in range(N_V_REFLECTORS - 1, -1, -1):
        v = vhat[i]
        alpha = 2.0 * (y @ v) / jnp.sum(v * v)
        y = y - alpha[:, None] * v[None, :]
    return y + bias


# ------------------------------------------------------------------ main ----
if __name__ == "__main__":
    key = jax.random.PRNGKey(0)
    kx, kparam = jax.random.split(key)

    x = jax.random.normal(kx, (BATCH, IN_FEATURES), jnp.float32)
    uhat, sigma_vec, vhat, bias = make_params(kparam)

    # Precompose the reflector chains + Sigma once (parameter-only work).
    w_eff = effective_weight(uhat, sigma_vec, vhat, OUT_FEATURES)

    # Module reference (bias=False -> zero bias).
    ref = reference_forward(x, uhat, sigma_vec, vhat, bias)

    # 1) f32 Pallas path: tight check of the kernel itself.
    out_f32 = spectral_linear(x, w_eff, bias=None,
                              input_dtype=jnp.float32, force_pallas=True)
    out_f32 = jax.block_until_ready(out_f32)
    assert out_f32.shape == (BATCH, OUT_FEATURES)
    err32 = float(jnp.max(jnp.abs(out_f32 - ref)))
    assert err32 < 1e-3, f"f32 path max abs err {err32}"

    # 2) bf16-input Pallas path (production default): check against a
    #    bf16-quantized XLA matmul (tight) and the f32 module reference (loose).
    out_bf16 = spectral_linear(x, w_eff, bias=None, force_pallas=True)
    out_bf16 = jax.block_until_ready(out_bf16)
    ref_bf16 = jnp.dot(x.astype(jnp.bfloat16), w_eff.astype(jnp.bfloat16),
                       preferred_element_type=jnp.float32)
    err_q = float(jnp.max(jnp.abs(out_bf16 - ref_bf16)))
    err_m = float(jnp.max(jnp.abs(out_bf16 - ref)))
    assert err_q < 2e-3, f"bf16 path vs quantized XLA ref, max abs err {err_q}"
    assert err_m < 1e-1, f"bf16 path vs module ref, max abs err {err_m}"

    print("KERNEL_OK")
</pallas_src>

<mosaic_0001>
module attributes {stable_mosaic.version = 11 : i64} {
  func.func @_mm_kernel(%arg0: i32, %arg1: memref<2x192xf32, #tpu.memory_space<vmem>>, %arg2: memref<192x128xf32, #tpu.memory_space<vmem>>, %arg3: memref<2x128xf32, #tpu.memory_space<vmem>>) attributes {dimension_semantics = [#tpu.dimension_semantics<parallel>], iteration_bounds = array<i64: 1>, scalar_prefetch = 0 : i64, scratch_operands = 0 : i64, tpu.core_type = #tpu.core_type<tc>, window_params = [{transform_indices = @transform_0, window_bounds = array<i64: 2, 192>}, {pipeline_mode = #tpu.pipeline_mode<synchronous>, transform_indices = @transform_1, window_bounds = array<i64: 192, 128>}, {transform_indices = @transform_2, window_bounds = array<i64: 2, 128>}]} {
    %c0 = arith.constant 0 : index
    %c0_0 = arith.constant 0 : index
    %0 = vector.load %arg1[%c0, %c0_0] : memref<2x192xf32, #tpu.memory_space<vmem>>, vector<2x192xf32>
    %c0_1 = arith.constant 0 : index
    %c0_2 = arith.constant 0 : index
    %1 = vector.load %arg2[%c0_1, %c0_2] : memref<192x128xf32, #tpu.memory_space<vmem>>, vector<192x128xf32>
    %cst = arith.constant dense<0.000000e+00> : vector<2x128xf32>
    %2 = tpu.matmul %0, %1, %cst {dimension_numbers = #tpu.dot_dimension_numbers<[1], [0], [0], [1], [0, 0, 1, 1], [], []>} : vector<2x192xf32>, vector<192x128xf32>, vector<2x128xf32> -> vector<2x128xf32>
    %c0_3 = arith.constant 0 : index
    %c0_4 = arith.constant 0 : index
    %3 = vector.load %arg3[%c0_3, %c0_4] : memref<2x128xf32, #tpu.memory_space<vmem>>, vector<2x128xf32>
    tpu.vector_store %arg3[%c0_3, %c0_4], %2 {strides = array<i32>} : memref<2x128xf32, #tpu.memory_space<vmem>>, vector<2x128xf32>,
    return
  }
  func.func @transform_0(%arg0: i32) -> (i32, i32) {
    %c0_i32 = arith.constant 0 : i32
    %c0_i32_0 = arith.constant 0 : i32
    return %arg0, %c0_i32 : i32, i32
  }
  func.func @transform_1(%arg0: i32) -> (i32, i32) {
    %c0_i32 = arith.constant 0 : i32
    %c0_i32_0 = arith.constant 0 : i32
    %c0_i32_1 = arith.constant 0 : i32
    return %c0_i32, %c0_i32_0 : i32, i32
  }
  func.func @transform_2(%arg0: i32) -> (i32, i32) {
    %c0_i32 = arith.constant 0 : i32
    %c0_i32_0 = arith.constant 0 : i32
    return %arg0, %c0_i32 : i32, i32
  }
}

</mosaic_0001>

<llo_original>
// kernel: tpu_custom_call.1
$region0: #{tpu_custom_call.1}
  #allocation0 [shape = 'u32[]', space=smem, size = 0x4, offset = 0x4, fixed_abs, tag = 'smem constant byte address 0x4 - core index']
  #allocation1 [shape = 'u32[144,128]{1,0:T(1,128)}', space=vmem, size = 0x12000, scoped, tag = 'internal scratch']
  %s0 = inlined_call_operand.hbm [shape: f32[2,192], index: 0, kind: input, shape index: {}]
  %s1 = inlined_call_operand.hbm [shape: f32[192,128], index: 1, kind: input, shape index: {}]
  %s2 = inlined_call_operand.hbm [shape: f32[2,128], index: 2, kind: output, shape index: {}]
  %s3 = sld [smem:[#allocation0]]
  $region26: #{tpu_custom_call.1} parent=0
    _
  %s5 = ssub.s32 1, %s3
  %s6 = scalar_select 0, %s5, %s3
  $region1: #{tpu_custom_call.1} parent=0
    #allocation2 [shape = 'u8[2048]{0}', space=vmem, size = 0x800, scoped, tag = 'input window, operand 0, single buffered']
    #allocation3 [shape = 's32[1]{0}', space=sflag, size = 0x4, scoped, tag = 'scoped memory for tpu_custom_call.1']
    #allocation4 [shape = 's32[1]{0}', space=sflag, size = 0x4, scoped, tag = 'scoped memory for tpu_custom_call.1']
    #allocation5 [shape = 'u8[98304]{0}', space=vmem, size = 0x18000, scoped, tag = 'input window, operand 1, single buffered']
    #allocation6 [shape = 's32[1]{0}', space=sflag, size = 0x4, scoped, tag = 'scoped memory for tpu_custom_call.1']
    #allocation7 [shape = 'u8[1024]{0}', space=vmem, size = 0x400, scoped, tag = 'output window, operand 0, single buffered']
    %7 = vsyncpa [#allocation3], 0
    %8 = vsyncpa [#allocation6], 0
    %9 = vsyncpa [#allocation4], 0
    // Predicated region
    $region2: #{tpu_custom_call.1} parent=1 // pred_check
      _
    $region3: #{tpu_custom_call.1} parent=1 // pred_check_branch
      %11 = sbr.rel (0) target = $region5
    $region4: #{tpu_custom_call.1} parent=1 // pred_region
      %s13 = ssub.s32 64, 64
      %14 = vsyncadd [#allocation3], %s13
      %s16 = sshll.u32 [#allocation2], 4
      %s17 = int_to_ptr.vmem [resolvable:$true] %s16
      %19 = dma.hbm_to_vmem [thread:$0]  %s0, 64, %s17, [#allocation3]
    $region5: #{tpu_custom_call.1} parent=1 // pred_fallthru
      _
    // Predicated region
    $region6: #{tpu_custom_call.1} parent=1 // pred_check
      _
    $region7: #{tpu_custom_call.1} parent=1 // pred_check_branch
      %21 = sbr.rel (0) target = $region9
    $region8: #{tpu_custom_call.1} parent=1 // pred_region
      %s23 = ssub.s32 3072, 3072
      %24 = vsyncadd [#allocation6], %s23
      %s25 = sshll.u32 [#allocation5], 4
      %s26 = int_to_ptr.vmem [resolvable:$true] %s25
      %31 = dma.hbm_to_vmem [thread:$0]  %s1, 3072, %s26, [#allocation6], 128, 128, 8
    $region9: #{tpu_custom_call.1} parent=1 // pred_fallthru
      _
    // Predicated region
    $region10: #{tpu_custom_call.1} parent=1 // pred_check
      _
    $region11: #{tpu_custom_call.1} parent=1 // pred_check_branch
      %33 = sbr.rel (0) target = $region13
    $region12: #{tpu_custom_call.1} parent=1 // pred_region
      %34 = dma.done [#allocation3], 64
    $region13: #{tpu_custom_call.1} parent=1 // pred_fallthru
      _
    // Predicated region
    $region14: #{tpu_custom_call.1} parent=1 // pred_check
      _
    $region15: #{tpu_custom_call.1} parent=1 // pred_check_branch
      %36 = sbr.rel (0) target = $region17
    $region16: #{tpu_custom_call.1} parent=1 // pred_region
      %37 = dma.done [#allocation6], 3072
    $region17: #{tpu_custom_call.1} parent=1 // pred_fallthru
      _
    %v38 = vld [vmem:[#allocation2] sm:$0xf]
    %v39 = vld [vmem:[#allocation5] sm:$0xff]
    %v40 = vld [vmem:[#allocation5 + $0x8] sm:$0xff]
    %v41 = vld [vmem:[#allocation5 + $0x10] sm:$0xff]
    %v42 = vld [vmem:[#allocation5 + $0x18] sm:$0xff]
    %v43 = vld [vmem:[#allocation5 + $0x20] sm:$0xff]
    %v44 = vld [vmem:[#allocation5 + $0x28] sm:$0xff]
    %v45 = vld [vmem:[#allocation5 + $0x30] sm:$0xff]
    %v46 = vld [vmem:[#allocation5 + $0x38] sm:$0xff]
    %v47 = vld [vmem:[#allocation5 + $0x40] sm:$0xff]
    %v48 = vld [vmem:[#allocation5 + $0x48] sm:$0xff]
    %v49 = vld [vmem:[#allocation5 + $0x50] sm:$0xff]
    %v50 = vld [vmem:[#allocation5 + $0x58] sm:$0xff]
    %v51 = vld [vmem:[#allocation5 + $0x60] sm:$0xff]
    %v52 = vld [vmem:[#allocation5 + $0x68] sm:$0xff]
    %v53 = vld [vmem:[#allocation5 + $0x70] sm:$0xff]
    %v54 = vld [vmem:[#allocation5 + $0x78] sm:$0xff]
    %v55 = vld [vmem:[#allocation5 + $0x80] sm:$0xff]
    %v56 = vld [vmem:[#allocation5 + $0x88] sm:$0xff]
    %v57 = vld [vmem:[#allocation5 + $0x90] sm:$0xff]
    %v58 = vld [vmem:[#allocation5 + $0x98] sm:$0xff]
    %v59 = vld [vmem:[#allocation5 + $0xa0] sm:$0xff]
    %v60 = vld [vmem:[#allocation5 + $0xa8] sm:$0xff]
    %v61 = vld [vmem:[#allocation5 + $0xb0] sm:$0xff]
    %v62 = vld [vmem:[#allocation5 + $0xb8] sm:$0xff]
    %v65 = vunpack.c.l.s4 1983009808
    %v66 = vunpack.c.0.s8 %v65
    %v67 = vlaneseq
    %v68 = vshrl.u32 %v67, 7
    %v69 = vsub.s32 %v66, %v68
    %v70 = vrot.slane %v38, %v69
    %v71 = vcombine.high %v70, %v70
    %vm73 = vcmask 523264
    %v74 = vsel %vm73, %v71, 0
    %76 = vmatprep.subr.mxu0 0.0
    %77 = vmatpush1.msra.mxu0 %v39
    %78 = vmatprep.subr.mxu0 0.0
    %79 = vmatpush1.msra.mxu0 %v40
    %80 = vmatprep.subr.mxu0 0.0
    %81 = vmatpush1.msra.mxu0 %v41
    %82 = vmatprep.subr.mxu0 0.0
    %83 = vmatpush1.msra.mxu0 %v42
    %84 = vmatprep.subr.mxu0 0.0
    %85 = vmatpush1.msra.mxu0 %v43
    %86 = vmatprep.subr.mxu0 0.0
    %87 = vmatpush1.msra.mxu0 %v44
    %88 = vmatprep.subr.mxu0 0.0
    %89 = vmatpush1.msra.mxu0 %v45
    %90 = vmatprep.subr.mxu0 0.0
    %91 = vmatpush1.msra.mxu0 %v46
    %92 = vmatprep.subr.mxu0 0.0
    %93 = vmatpush1.msra.mxu0 %v47
    %94 = vmatprep.subr.mxu0 0.0
    %95 = vmatpush1.msra.mxu0 %v48
    %96 = vmatprep.subr.mxu0 0.0
    %97 = vmatpush1.msra.mxu0 %v49
    %98 = vmatprep.subr.mxu0 0.0
    %99 = vmatpush1.msra.mxu0 %v50
    %100 = vmatprep.subr.mxu0 0.0
    %101 = vmatpush1.msra.mxu0 %v51
    %102 = vmatprep.subr.mxu0 0.0
    %103 = vmatpush1.msra.mxu0 %v52
    %104 = vmatprep.subr.mxu0 0.0
    %105 = vmatpush1.msra.mxu0 %v53
    %106 = vmatprep.subr.mxu0 0.0
    %107 = vmatpush1.msra.mxu0 %v54
    %108 = vmatprep.subr.mxu0 0.0
    %109 = vmatpush1.msra.mxu0 %v55
    %110 = vmatprep.subr.mxu0 0.0
    %111 = vmatpush1.msra.mxu0 %v56
    %112 = vmatprep.subr.mxu0 0.0
    %113 = vmatpush1.msra.mxu0 %v57
    %114 = vmatprep.subr.mxu0 0.0
    %115 = vmatpush1.msra.mxu0 %v58
    %116 = vmatprep.subr.mxu0 0.0
    %117 = vmatpush1.msra.mxu0 %v59
    %118 = vmatprep.subr.mxu0 0.0
    %119 = vmatpush1.msra.mxu0 %v60
    %120 = vmatprep.subr.mxu0 0.0
    %121 = vmatpush1.msra.mxu0 %v61
    %122 = vmatprep.subr.mxu0 0.0
    %123 = vmatpush1.msra.mxu0 %v62
    %124 = vmatprep.subr.mxu0 0.0
    %125 = vmatpush1.msra.mxu0 0.0
    %126 = vmatprep.subr.mxu0 0.0
    %127 = vmatpush1.msra.mxu0 0.0
    %128 = vmatprep.subr.mxu0 0.0
    %129 = vmatpush1.msra.mxu0 0.0
    %130 = vmatprep.subr.mxu0 0.0
    %131 = vmatpush1.msra.mxu0 0.0
    %132 = vmatprep.subr.mxu0 0.0
    %133 = vmatpush1.msra.mxu0 0.0
    %134 = vmatprep.subr.mxu0 0.0
    %135 = vmatpush1.msra.mxu0 0.0
    %136 = vmatprep.subr.mxu0 0.0
    %137 = vmatpush1.msra.mxu0 0.0
    %138 = vmatprep.subr.mxu0 0.0
    %139 = vmatpush1.msra.mxu0 0.0
    %140 = vmatprep.mubr.f32.mxu0 %v74
    %141 = vmatmul.mubr.f32.gmra.mrb[0].mxu0 %v70
    %v142 = vpop.f32.mrb[0].mxu0
    %v143 = vadd.f32 0.0, %v142
    %v144 = vpop.f32.mrb[0].mxu0
    %145 = vdwg.mxu0
    %146 = vst [vmem:[#allocation7] sm:$0x3] %v143
    // Predicated region
    $region18: #{tpu_custom_call.1} parent=1 // pred_check
      _
    $region19: #{tpu_custom_call.1} parent=1 // pred_check_branch
      %148 = sbr.rel (0) target = $region21
    $region20: #{tpu_custom_call.1} parent=1 // pred_region
      %s150 = ssub.s32 32, 32
      %151 = vsyncadd [#allocation4], %s150
      %s153 = sshll.u32 [#allocation7], 4
      %s154 = int_to_ptr.vmem [resolvable:$true] %s153
      %156 = dma.vmem_to_hbm [thread:$0]  %s154, 32, %s2, [#allocation4]
    $region21: #{tpu_custom_call.1} parent=1 // pred_fallthru
      _
    // Predicated region
    $region22: #{tpu_custom_call.1} parent=1 // pred_check
      _
    $region23: #{tpu_custom_call.1} parent=1 // pred_check_branch
      %158 = sbr.rel (0) target = $region25
    $region24: #{tpu_custom_call.1} parent=1 // pred_region
      %159 = dma.done [#allocation4], 32
    $region25: #{tpu_custom_call.1} parent=1 // pred_fallthru
      _
    %160 = vsyncpa [#allocation3], 1
    %161 = vsyncpa [#allocation6], 1
    %162 = vsyncpa [#allocation4], 1

</llo_original>
